<compile_context>
chip_gen: v7x
topology: tpu7x:2x2x1
jax: 0.10.0
libtpu: 0.0.40
codegen_flags: <defaults>
</compile_context>

<pallas_src>
import jax
import jax.numpy as jnp
from jax.experimental import pallas as pl
from jax.experimental.pallas import tpu as pltpu

_LANE = 128                          # TPU vreg lane width
_SUBLANE = {1: 32, 2: 16, 4: 8}      # itemsize -> native sublane packing
_TILE_BYTES_PER_OPERAND = 2 << 20    # 2 MiB per operand tile; 3 operands x 2
                                     # pipeline buffers = 12 MiB of VMEM.
_VMEM_LIMIT_BYTES = 32 << 20         # explicit: > v5e 16-MiB scoped default,
                                     # < v7x 64-MiB physical.
_XLA_FASTPATH_BYTES = 128 << 10      # below this, a fused XLA add beats the
                                     # pallas_call launch + per-step overhead.
_MIN_ROW_BLOCKS = 4                  # target >= 4 row blocks: pipelining + v7x 2 TCs


def _pe_add_kernel(x_ref, pe_ref, o_ref):
    # x_ref / pe_ref / o_ref are (row_tile, lane) blocks of the same dtype.
    # Batch dim is squeezed away by the BlockSpec -> no in-kernel broadcast.
    o_ref[...] = x_ref[...] + pe_ref[...]


def build_positional_encoding(vocab_len: int, d_model: int,
                              dtype=jnp.float32) -> jnp.ndarray:
    """Deterministic PE table, identical math to the PyTorch __init__.

    Build it ONCE at model init in the model's compute dtype so forward never
    has to slice+cast it (that was a full extra HBM pass per call)."""
    if d_model % 2 != 0:
        raise ValueError("d_model must be even (sin/cos interleave).")
    pos = jnp.arange(vocab_len, dtype=jnp.float32)[:, None]       # (V, 1)
    two_i = jnp.arange(0, d_model, 2, dtype=jnp.float32)          # (D/2,)
    data = pos / (10000.0 ** (two_i / d_model))                   # (V, D/2)
    pe = jnp.zeros((vocab_len, d_model), dtype=jnp.float32)
    pe = pe.at[:, 0::2].set(jnp.sin(data))
    pe = pe.at[:, 1::2].set(jnp.cos(data))
    return pe.astype(dtype)


def _choose_row_tile(n_rows: int, lane: int, itemsize: int) -> int:
    """Sublane-aligned row tile that (a) fits the per-operand VMEM budget and
    (b) yields >= _MIN_ROW_BLOCKS grid steps for pipelining / v7x dual-TC."""
    sub = _SUBLANE.get(itemsize, 8)
    if n_rows <= sub:
        return n_rows                                  # full extent (allowed)
    max_rows = max(_TILE_BYTES_PER_OPERAND // (lane * itemsize), sub)
    max_rows = (max_rows // sub) * sub
    target = -(-n_rows // _MIN_ROW_BLOCKS)             # cdiv
    target = ((target + sub - 1) // sub) * sub         # round up to sublane
    return max(sub, min(max_rows, target))


def _tiled_broadcast_add(x3: jnp.ndarray, pe2: jnp.ndarray, row_tile: int,
                         donate_x: bool = False) -> jnp.ndarray:
    """out[b, r, :] = x3[b, r, :] + pe2[r, :], tiled over (rows, batch).

    pe2 may have MORE rows than x3 (e.g. the full PE table); only the first
    cdiv(R, row_tile) row tiles are ever indexed by the grid."""
    B, R, L = x3.shape
    itemsize = jnp.dtype(x3.dtype).itemsize
    grid = (pl.cdiv(R, row_tile), B)   # rows outer, batch inner: the PE tile is
                                       # reused (not re-DMA'd) across batch.
    extra = {}
    if donate_x:
        # Only when the caller no longer needs x: removes a potential XLA copy
        # at the call boundary and halves peak HBM footprint.
        extra["input_output_aliases"] = {0: 0}
    return pl.pallas_call(
        _pe_add_kernel,
        out_shape=jax.ShapeDtypeStruct((B, R, L), x3.dtype),
        grid_spec=pltpu.PrefetchScalarGridSpec(
            num_scalar_prefetch=0,
            grid=grid,
            in_specs=[
                # x: batch dim squeezed -> kernel sees (row_tile, L)
                pl.BlockSpec((None, row_tile, L), lambda s, b: (b, s, 0)),
                # pe: shared over batch, tiled over rows only
                pl.BlockSpec((row_tile, L), lambda s, b: (s, 0)),
            ],
            out_specs=pl.BlockSpec((None, row_tile, L), lambda s, b: (b, s, 0)),
        ),
        compiler_params=pltpu.CompilerParams(
            # rows axis shardable across v7x's two TensorCores; batch kept
            # sequential so the PE tile is reused across batch within a core.
            dimension_semantics=("parallel", "arbitrary"),
            vmem_limit_bytes=_VMEM_LIMIT_BYTES,
        ),
        cost_estimate=pl.CostEstimate(
            flops=B * R * L,
            transcendentals=0,
            bytes_accessed=(2 * B + 1) * R * L * itemsize,
        ),
        **extra,
    )(x3, pe2)


def positional_encoding_forward(x: jnp.ndarray, pe: jnp.ndarray,
                                *, donate_x: bool = False) -> jnp.ndarray:
    """x: (B, S, D); pe: (vocab_len, D). Returns dropout(x + pe[:S]) (eval mode)."""
    B, S, D = x.shape
    V, Dp = pe.shape
    if V < S:
        raise ValueError(f"PE table too short: vocab_len={V} < seq_len={S}")
    if Dp != D:
        raise ValueError(f"d_model mismatch: pe has {Dp}, x has {D}")

    if pe.dtype != x.dtype:
        # Prefer building the table in x.dtype at init (see
        # build_positional_encoding(dtype=...)) so this never runs per call.
        pe = pe.astype(x.dtype)

    itemsize = jnp.dtype(x.dtype).itemsize
    total_bytes = B * S * D * itemsize

    # Tiny tensors: pallas_call launch + ~0.35 us/step overhead dominates; a
    # plain XLA fusion already hits the same HBM roofline.
    if total_bytes < _XLA_FASTPATH_BYTES:
        return x + pe[:S, :][None, :, :]

    flat = S * D
    if D % _LANE == 0:
        # Direct path: pass the FULL table; the rows index_map bounds the reads
        # to the first cdiv(S, row_tile) tiles -> no pe[:S] copy in HBM.
        x3, pe2, R, L = x, pe, S, D
    elif flat % _LANE == 0:
        # Lane-dense repack for small / non-128-multiple d_model:
        # (B, S, D) -> (B, S*D/128, 128) so stores are full-lane (no masked vst).
        R, L = flat // _LANE, _LANE
        x3 = x.reshape(B, R, L)
        if (V * D) % _LANE == 0:
            # Full-table reshape is a free bitcast, and because pe[:S] is a
            # row-major prefix of pe, its flattened rows are exactly the first
            # R rows of this reshape -> still no per-call slice materialized.
            pe2 = pe.reshape(-1, L)
        else:
            pe2 = pe[:S, :].reshape(R, L)
    else:
        # Awkward d_model: every Pallas row store would be lane-masked
        # (measured ~4.5x slower than lane-dense). Fall back to XLA fusion.
        # TODO(synk): pad d_model / the PE table to a multiple of 128 at model
        #             init time to put these shapes on the fast path.
        return x + pe[:S, :][None, :, :]

    row_tile = _choose_row_tile(R, L, itemsize)
    out3 = _tiled_broadcast_add(x3, pe2, row_tile, donate_x=donate_x)

    # TODO(synk): training-mode dropout would need TPU PRNG (pltpu.prng_*) and
    #             cannot bit-match torch's RNG stream; eval-mode dropout is identity.
    return out3.reshape(B, S, D)


if __name__ == "__main__":
    key = jax.random.PRNGKey(0)
    k0, k1, k2 = jax.random.split(key, 3)

    # Case 1: tiny module-consistent shape (hits the XLA fast path).
    batch, seq, d_model = 2, 8, 32
    pe_small = build_positional_encoding(16, d_model, dtype=jnp.float32)
    x = jax.random.normal(k0, (batch, seq, d_model), dtype=jnp.float32)
    out = jax.block_until_ready(positional_encoding_forward(x, pe_small))
    ref = x + pe_small[:seq, :][None, :, :]
    assert out.shape == (batch, seq, d_model)
    assert jnp.allclose(out, ref, atol=1e-6), "mismatch (tiny / fast path)"

    # Case 2: lane-aligned d_model -> direct Pallas path (full PE table passed).
    b2, s2, d2 = 2, 256, 256
    pe_big = build_positional_encoding(512, d2, dtype=jnp.float32)
    x2 = jax.random.normal(k1, (b2, s2, d2), dtype=jnp.float32)
    out2 = jax.block_until_ready(positional_encoding_forward(x2, pe_big))
    ref2 = x2 + pe_big[:s2, :][None, :, :]
    assert jnp.allclose(out2, ref2, atol=1e-6), "mismatch (aligned-D Pallas path)"

    # Case 3: small d_model -> lane-dense repack Pallas path (bitcast PE).
    b3, s3, d3 = 2, 1024, 32
    pe_rep = build_positional_encoding(2048, d3, dtype=jnp.float32)
    x3 = jax.random.normal(k2, (b3, s3, d3), dtype=jnp.float32)
    out3 = jax.block_until_ready(positional_encoding_forward(x3, pe_rep))
    ref3 = x3 + pe_rep[:s3, :][None, :, :]
    assert jnp.allclose(out3, ref3, atol=1e-6), "mismatch (repack Pallas path)"

    print("KERNEL_OK")
</pallas_src>

<mosaic_0001>
module attributes {stable_mosaic.version = 11 : i64} {
  func.func @_pe_add_kernel(%arg0: i32, %arg1: i32, %arg2: memref<1x64x256xf32, #tpu.memory_space<vmem>>, %arg3: memref<64x256xf32, #tpu.memory_space<vmem>>, %arg4: memref<1x64x256xf32, #tpu.memory_space<vmem>>) attributes {dimension_semantics = [#tpu.dimension_semantics<parallel>, #tpu.dimension_semantics<arbitrary>], iteration_bounds = array<i64: 4, 2>, scalar_prefetch = 0 : i64, scratch_operands = 0 : i64, tpu.core_type = #tpu.core_type<tc>, window_params = [{transform_indices = @transform_0, window_bounds = array<i64: 1, 64, 256>}, {transform_indices = @transform_1, window_bounds = array<i64: 64, 256>}, {transform_indices = @transform_2, window_bounds = array<i64: 1, 64, 256>}]} {
    %c0 = arith.constant 0 : index
    %c0_0 = arith.constant 0 : index
    %c0_1 = arith.constant 0 : index
    %0 = vector.load %arg2[%c0, %c0_0, %c0_1] : memref<1x64x256xf32, #tpu.memory_space<vmem>>, vector<1x64x256xf32>
    %1 = vector.shape_cast %0 : vector<1x64x256xf32> to vector<64x256xf32>
    %c0_2 = arith.constant 0 : index
    %c0_3 = arith.constant 0 : index
    %2 = vector.load %arg3[%c0_2, %c0_3] : memref<64x256xf32, #tpu.memory_space<vmem>>, vector<64x256xf32>
    %3 = arith.addf %1, %2 : vector<64x256xf32>
    %c0_4 = arith.constant 0 : index
    %c0_5 = arith.constant 0 : index
    %c0_6 = arith.constant 0 : index
    %4 = vector.load %arg4[%c0_4, %c0_5, %c0_6] : memref<1x64x256xf32, #tpu.memory_space<vmem>>, vector<1x64x256xf32>
    %5 = vector.shape_cast %4 : vector<1x64x256xf32> to vector<64x256xf32>
    %6 = vector.shape_cast %3 : vector<64x256xf32> to vector<1x64x256xf32>
    tpu.vector_store %arg4[%c0_4, %c0_5, %c0_6], %6 {strides = array<i32>} : memref<1x64x256xf32, #tpu.memory_space<vmem>>, vector<1x64x256xf32>,
    return
  }
  func.func @transform_0(%arg0: i32, %arg1: i32) -> (i32, i32, i32) {
    %c0_i32 = arith.constant 0 : i32
    %c0_i32_0 = arith.constant 0 : i32
    return %arg1, %arg0, %c0_i32 : i32, i32, i32
  }
  func.func @transform_1(%arg0: i32, %arg1: i32) -> (i32, i32) {
    %c0_i32 = arith.constant 0 : i32
    %c0_i32_0 = arith.constant 0 : i32
    return %arg0, %c0_i32 : i32, i32
  }
  func.func @transform_2(%arg0: i32, %arg1: i32) -> (i32, i32, i32) {
    %c0_i32 = arith.constant 0 : i32
    %c0_i32_0 = arith.constant 0 : i32
    return %arg1, %arg0, %c0_i32 : i32, i32, i32
  }
}

</mosaic_0001>

<llo_original>
// kernel: tpu_custom_call.1
$region0: #{tpu_custom_call.1}
  #allocation0 [shape = 'u32[]', space=smem, size = 0x4, offset = 0x4, fixed_abs, tag = 'smem constant byte address 0x4 - core index']
  #allocation1 [shape = 'u32[144,128]{1,0:T(1,128)}', space=vmem, size = 0x12000, scoped, tag = 'internal scratch']
  %s0 = inlined_call_operand.hbm [shape: f32[2,256,256], index: 0, kind: input, shape index: {}]
  %s1 = inlined_call_operand.hbm [shape: f32[512,256], index: 1, kind: input, shape index: {}]
  %s2 = inlined_call_operand.hbm [shape: f32[2,256,256], index: 2, kind: output, shape index: {}]
  %s3 = sld [smem:[#allocation0]]
  $region49: #{tpu_custom_call.1} parent=0
    _
  %s5 = ssub.s32 1, %s3
  %s6 = scalar_select 0, %s5, %s3
  $region1: #{tpu_custom_call.1} parent=0
    #allocation2 [shape = 'u8[131072]{0}', space=vmem, size = 0x20000, scoped, tag = 'input window, operand 0']
    #allocation3 [shape = 's32[2]{0}', space=sflag, size = 0x8, scoped, tag = 'scoped memory for tpu_custom_call.1']
    #allocation4 [shape = 's32[2]{0}', space=sflag, size = 0x8, scoped, tag = 'scoped memory for tpu_custom_call.1']
    #allocation5 [shape = 'u8[131072]{0}', space=vmem, size = 0x20000, scoped, tag = 'input window, operand 1']
    #allocation6 [shape = 's32[2]{0}', space=sflag, size = 0x8, scoped, tag = 'scoped memory for tpu_custom_call.1']
    #allocation7 [shape = 'u8[131072]{0}', space=vmem, size = 0x20000, scoped, tag = 'output window, operand 0']
    %7 = vsyncpa [#allocation3], 0
    %s8 = scalar_lea.sflag [#allocation3], 1
    %9 = vsyncpa %s8, 0
    %10 = vsyncpa [#allocation6], 0
    %s11 = scalar_lea.sflag [#allocation6], 1
    %12 = vsyncpa %s11, 0
    %13 = vsyncpa [#allocation4], 0
    %s14 = scalar_lea.sflag [#allocation4], 1
    %15 = vsyncpa %s14, 0
    loop: start=0, step=1, limit=10
    $region2: #{tpu_custom_call.1} parent=1 // loop_pre_header
      _
    $region3: #{tpu_custom_call.1} parent=1 // loop_header
      %s17 = sphi 0, %s21
      %p18 = scmp.ge.s32.totalorder %s17, 10
      %s24 = sphi 0, %s36
      %s25 = sphi 0, %s32
      %s26 = sphi 0, %s24
      %s27 = sphi 0, %s25
      %s28 = sphi 0, %s26
      %s29 = sphi 0, %s27
      %s41 = sphi 0, %s43
      %s44 = sphi 0, %s41
      %s45 = sphi 0, %s44
      %s61 = sphi 0, %s45
      %s67 = sphi 0, %s69
      %s70 = sphi 0, %s67
      %s71 = sphi 0, %s70
      %s87 = sphi 0, %s71
      %s95 = sphi 0, %s97
      %s98 = sphi 0, %s95
      %s99 = sphi 0, %s98
      %s115 = sphi 0, %s99
    $region4: #{tpu_custom_call.1} parent=1 // loop_header_branch
      %20 = sbr.rel (%p18) target = $region8
    $region5: #{tpu_custom_call.1} parent=1 // loop_body
      %s22 = ssub.s32 %s17, 1
      %s23 = ssub.s32 %s17, 2
      %s30 = sadd.s32 1, %s25
      %p31 = scmp.ge.s32.totalorder %s30, 2
      %s32 = scalar_select %p31, 0, %s30
      %s33 = sadd.s32 1, %s24
      %s34 = scalar_select %p31, %s33, %s24
      %p35 = scmp.ge.s32.totalorder %s34, 4
      %s36 = scalar_select %p35, 0, %s34
      %s37 = ssub.s32 %s25, %s32
      %s38 = ssub.s32 %s24, %s36
      %s39 = sor.u32 %s37, %s38
      %p40 = scmp.eq.s32.totalorder %s39, 0
      %s42 = sadd.s32 %s41, 1
      %s43 = scalar_select %p40, %s41, %s42
      %p46 = pneg %p40
      %p47 = scmp.eq.s32.totalorder %s17, 7
      %p48 = por %p46, %p47
      %p49 = scmp.ne.s32.totalorder %s41, %s44
      %p50 = scmp.eq.s32.totalorder %s17, 0
      %p51 = por %p49, %p50
      %p52 = scmp.ne.s32.totalorder %s41, %s44
      %p53 = scmp.eq.s32.totalorder %s22, 7
      %p54 = por %p52, %p53
      %p55 = scmp.ne.s32.totalorder %s44, %s45
      %p56 = scmp.eq.s32.totalorder %s22, 0
      %p57 = por %p55, %p56
      %p58 = scmp.ne.s32.totalorder %s44, %s45
      %p59 = scmp.eq.s32.totalorder %s23, 7
      %p60 = por %p58, %p59
      %p62 = scmp.ne.s32.totalorder %s45, %s61
      %p63 = scmp.eq.s32.totalorder %s23, 0
      %p64 = por %p62, %p63
      %s65 = ssub.s32 %s24, %s36
      %p66 = scmp.eq.s32.totalorder %s65, 0
      %s68 = sadd.s32 %s67, 1
      %s69 = scalar_select %p66, %s67, %s68
      %p72 = pneg %p66
      %p73 = scmp.eq.s32.totalorder %s17, 7
      %p74 = por %p72, %p73
      %p75 = scmp.ne.s32.totalorder %s67, %s70
      %p76 = scmp.eq.s32.totalorder %s17, 0
      %p77 = por %p75, %p76
      %p78 = scmp.ne.s32.totalorder %s67, %s70
      %p79 = scmp.eq.s32.totalorder %s22, 7
      %p80 = por %p78, %p79
      %p81 = scmp.ne.s32.totalorder %s70, %s71
      %p82 = scmp.eq.s32.totalorder %s22, 0
      %p83 = por %p81, %p82
      %p84 = scmp.ne.s32.totalorder %s70, %s71
      %p85 = scmp.eq.s32.totalorder %s23, 7
      %p86 = por %p84, %p85
      %p88 = scmp.ne.s32.totalorder %s71, %s87
      %p89 = scmp.eq.s32.totalorder %s23, 0
      %p90 = por %p88, %p89
      %s91 = ssub.s32 %s25, %s32
      %s92 = ssub.s32 %s24, %s36
      %s93 = sor.u32 %s91, %s92
      %p94 = scmp.eq.s32.totalorder %s93, 0
      %s96 = sadd.s32 %s95, 1
      %s97 = scalar_select %p94, %s95, %s96
      %p100 = pneg %p94
      %p101 = scmp.eq.s32.totalorder %s17, 7
      %p102 = por %p100, %p101
      %p103 = scmp.ne.s32.totalorder %s95, %s98
      %p104 = scmp.eq.s32.totalorder %s17, 0
      %p105 = por %p103, %p104
      %p106 = scmp.ne.s32.totalorder %s95, %s98
      %p107 = scmp.eq.s32.totalorder %s22, 7
      %p108 = por %p106, %p107
      %p109 = scmp.ne.s32.totalorder %s98, %s99
      %p110 = scmp.eq.s32.totalorder %s22, 0
      %p111 = por %p109, %p110
      %p112 = scmp.ne.s32.totalorder %s98, %s99
      %p113 = scmp.eq.s32.totalorder %s23, 7
      %p114 = por %p112, %p113
      %p116 = scmp.ne.s32.totalorder %s99, %s115
      %p117 = scmp.eq.s32.totalorder %s23, 0
      %p118 = por %p116, %p117
      %p119 = scmp.le.s32.totalorder 1, %s17
      %p120 = scmp.lt.s32.totalorder %s17, 9
      %p121 = pnand %p119, %p120
      %p122 = pneg %p121
      // Predicated region
      $region9: #{tpu_custom_call.1} parent=5 // pred_check
        _
      $region10: #{tpu_custom_call.1} parent=5 // pred_check_branch
        %124 = sbr.rel (%p121) target = $region12
      $region11: #{tpu_custom_call.1} parent=5 // pred_region
        %s125 = ssub.s32 %s17, 1
      $region12: #{tpu_custom_call.1} parent=5 // pred_fallthru
        _
      %p126 = scmp.lt.s32.totalorder %s17, 8
      // Predicated region
      $region13: #{tpu_custom_call.1} parent=5 // pred_check
        %p127 = pneg %p126
      $region14: #{tpu_custom_call.1} parent=5 // pred_check_branch
        %129 = sbr.rel (%p127) target = $region16
      $region15: #{tpu_custom_call.1} parent=5 // pred_region
        // Predicated region
        $region17: #{tpu_custom_call.1} parent=15 // pred_check
          %p130 = pneg %p51
        $region18: #{tpu_custom_call.1} parent=15 // pred_check_branch
          %132 = sbr.rel (%p130) target = $region20
        $region19: #{tpu_custom_call.1} parent=15 // pred_region
          %s133 = sand.u32 %s41, 1
          %s134 = scalar_lea.sflag [#allocation3], %s133
          %s135 = sand.u32 %s41, 1
          %s136 = smul.addr %s135, 128
          %s137 = scalar_lea.vmem [#allocation2], %s136
          %s138 = smul.u32 8, %s24
          %s140 = ssub.s32 2048, 2048
          %141 = vsyncadd %s134, %s140
          %s142 = smul.addr %s138, 2
          %s143 = smul.addr %s25, 64
          %s144 = sadd.s32 %s142, %s143
          %s145 = smul.addr %s144, 128
          %s146 = scalar_lea.hbm %s0, %s145
          %s147 = sshll.u32 %s137, 4
          %s148 = int_to_ptr.vmem [resolvable:$true] %s147
          %153 = dma.hbm_to_vmem [thread:$0]  %s146, 2048, %s148, %s134, 256, 256, 16
        $region20: #{tpu_custom_call.1} parent=15 // pred_fallthru
          _
        // Predicated region
        $region21: #{tpu_custom_call.1} parent=15 // pred_check
          %p154 = pneg %p77
        $region22: #{tpu_custom_call.1} parent=15 // pred_check_branch
          %156 = sbr.rel (%p154) target = $region24
        $region23: #{tpu_custom_call.1} parent=15 // pred_region
          %s157 = sand.u32 %s67, 1
          %s158 = scalar_lea.sflag [#allocation6], %s157
          %s159 = sand.u32 %s67, 1
          %s160 = smul.addr %s159, 128
          %s161 = scalar_lea.vmem [#allocation5], %s160
          %s162 = smul.u32 8, %s24
          %s164 = ssub.s32 2048, 2048
          %165 = vsyncadd %s158, %s164
          %s166 = smul.addr %s162, 2
          %s167 = smul.addr %s166, 128
          %s168 = scalar_lea.hbm %s1, %s167
          %s169 = sshll.u32 %s161, 4
          %s170 = int_to_ptr.vmem [resolvable:$true] %s169
          %175 = dma.hbm_to_vmem [thread:$0]  %s168, 2048, %s170, %s158, 256, 256, 16
        $region24: #{tpu_custom_call.1} parent=15 // pred_fallthru
          _
      $region16: #{tpu_custom_call.1} parent=5 // pred_fallthru
        _
      %p176 = scmp.le.s32.totalorder 1, %s17
      %p177 = scmp.lt.s32.totalorder %s17, 9
      %p178 = pnand %p176, %p177
      %p179 = pneg %p178
      // Predicated region
      $region25: #{tpu_custom_call.1} parent=5 // pred_check
        _
      $region26: #{tpu_custom_call.1} parent=5 // pred_check_branch
        %181 = sbr.rel (%p178) target = $region28
      $region27: #{tpu_custom_call.1} parent=5 // pred_region
        %s182 = ssub.s32 %s17, 1
        %s183 = sand.u32 %s44, 1
        %s184 = scalar_lea.sflag [#allocation3], %s183
        %s185 = sand.u32 %s44, 1
        %s186 = smul.addr %s185, 128
        %s187 = scalar_lea.vmem [#allocation2], %s186
        // Predicated region
        $region29: #{tpu_custom_call.1} parent=27 // pred_check
          %p188 = pneg %p57
        $region30: #{tpu_custom_call.1} parent=27 // pred_check_branch
          %190 = sbr.rel (%p188) target = $region32
        $region31: #{tpu_custom_call.1} parent=27 // pred_region
          %191 = dma.done %s184, 2048
        $region32: #{tpu_custom_call.1} parent=27 // pred_fallthru
          _
        %s192 = sand.u32 %s70, 1
        %s193 = scalar_lea.sflag [#allocation6], %s192
        %s194 = sand.u32 %s70, 1
        %s195 = smul.addr %s194, 128
        %s196 = scalar_lea.vmem [#allocation5], %s195
        // Predicated region
        $region33: #{tpu_custom_call.1} parent=27 // pred_check
          %p197 = pneg %p83
        $region34: #{tpu_custom_call.1} parent=27 // pred_check_branch
          %199 = sbr.rel (%p197) target = $region36
        $region35: #{tpu_custom_call.1} parent=27 // pred_region
          %200 = dma.done %s193, 2048
        $region36: #{tpu_custom_call.1} parent=27 // pred_fallthru
          _
        %s201 = sand.u32 %s44, 1
        %s202 = scalar_lea.sflag [#allocation3], %s201
        %s203 = sand.u32 %s44, 1
        %s204 = smul.addr %s203, 128
        %s205 = scalar_lea.vmem [#allocation2], %s204
        %p206 = pneg %p57
        %p207 = pneg %p54
        %s208 = sand.u32 %s70, 1
        %s209 = scalar_lea.sflag [#allocation6], %s208
        %s210 = sand.u32 %s70, 1
        %s211 = smul.addr %s210, 128
        %s212 = scalar_lea.vmem [#allocation5], %s211
        %p213 = pneg %p83
        %p214 = pneg %p80
        %p215 = pneg %p111
        %p216 = pneg %p108
        %s217 = sand.u32 %s98, 1
        %s218 = scalar_lea.sflag [#allocation4], %s217
        %s219 = sand.u32 %s98, 1
        %s220 = smul.addr %s219, 128
        %s221 = scalar_lea.vmem [#allocation7], %s220
        %s222 = smul.u32 8, %s26
        %s223 = smul.u32 8, %s26
        %s224 = smul.u32 8, %s26
        %v225 = vld [vmem:[%s187] sm:$0xff]
        %v226 = vld [vmem:[%s187 + $0x8] sm:$0xff]
        %v227 = vld [vmem:[%s187 + $0x10] sm:$0xff]
        %v228 = vld [vmem:[%s187 + $0x18] sm:$0xff]
        %v229 = vld [vmem:[%s187 + $0x20] sm:$0xff]
        %v230 = vld [vmem:[%s187 + $0x28] sm:$0xff]
        %v231 = vld [vmem:[%s187 + $0x30] sm:$0xff]
        %v232 = vld [vmem:[%s187 + $0x38] sm:$0xff]
        %v233 = vld [vmem:[%s187 + $0x40] sm:$0xff]
        %v234 = vld [vmem:[%s187 + $0x48] sm:$0xff]
        %v235 = vld [vmem:[%s187 + $0x50] sm:$0xff]
        %v236 = vld [vmem:[%s187 + $0x58] sm:$0xff]
        %v237 = vld [vmem:[%s187 + $0x60] sm:$0xff]
        %v238 = vld [vmem:[%s187 + $0x68] sm:$0xff]
        %v239 = vld [vmem:[%s187 + $0x70] sm:$0xff]
        %v240 = vld [vmem:[%s187 + $0x78] sm:$0xff]
        %v241 = vld [vmem:[%s196] sm:$0xff]
        %v242 = vld [vmem:[%s196 + $0x8] sm:$0xff]
        %v243 = vld [vmem:[%s196 + $0x10] sm:$0xff]
        %v244 = vld [vmem:[%s196 + $0x18] sm:$0xff]
        %v245 = vld [vmem:[%s196 + $0x20] sm:$0xff]
        %v246 = vld [vmem:[%s196 + $0x28] sm:$0xff]
        %v247 = vld [vmem:[%s196 + $0x30] sm:$0xff]
        %v248 = vld [vmem:[%s196 + $0x38] sm:$0xff]
        %v249 = vld [vmem:[%s196 + $0x40] sm:$0xff]
        %v250 = vld [vmem:[%s196 + $0x48] sm:$0xff]
        %v251 = vld [vmem:[%s196 + $0x50] sm:$0xff]
        %v252 = vld [vmem:[%s196 + $0x58] sm:$0xff]
        %v253 = vld [vmem:[%s196 + $0x60] sm:$0xff]
        %v254 = vld [vmem:[%s196 + $0x68] sm:$0xff]
        %v255 = vld [vmem:[%s196 + $0x70] sm:$0xff]
        %v256 = vld [vmem:[%s196 + $0x78] sm:$0xff]
        %v257 = vadd.f32 %v225, %v241
        %v258 = vadd.f32 %v226, %v242
        %v259 = vadd.f32 %v227, %v243
        %v260 = vadd.f32 %v228, %v244
        %v261 = vadd.f32 %v229, %v245
        %v262 = vadd.f32 %v230, %v246
        %v263 = vadd.f32 %v231, %v247
        %v264 = vadd.f32 %v232, %v248
        %v265 = vadd.f32 %v233, %v249
        %v266 = vadd.f32 %v234, %v250
        %v267 = vadd.f32 %v235, %v251
        %v268 = vadd.f32 %v236, %v252
        %v269 = vadd.f32 %v237, %v253
        %v270 = vadd.f32 %v238, %v254
        %v271 = vadd.f32 %v239, %v255
        %v272 = vadd.f32 %v240, %v256
        %273 = vst [vmem:[%s221] sm:$0xff] %v257
        %274 = vst [vmem:[%s221 + $0x8] sm:$0xff] %v258
        %275 = vst [vmem:[%s221 + $0x10] sm:$0xff] %v259
        %276 = vst [vmem:[%s221 + $0x18] sm:$0xff] %v260
        %277 = vst [vmem:[%s221 + $0x20] sm:$0xff] %v261
        %278 = vst [vmem:[%s221 + $0x28] sm:$0xff] %v262
        %279 = vst [vmem:[%s221 + $0x30] sm:$0xff] %v263
        %280 = vst [vmem:[%s221 + $0x38] sm:$0xff] %v264
        %281 = vst [vmem:[%s221 + $0x40] sm:$0xff] %v265
        %282 = vst [vmem:[%s221 + $0x48] sm:$0xff] %v266
        %283 = vst [vmem:[%s221 + $0x50] sm:$0xff] %v267
        %284 = vst [vmem:[%s221 + $0x58] sm:$0xff] %v268
        %285 = vst [vmem:[%s221 + $0x60] sm:$0xff] %v269
        %286 = vst [vmem:[%s221 + $0x68] sm:$0xff] %v270
        %287 = vst [vmem:[%s221 + $0x70] sm:$0xff] %v271
        %288 = vst [vmem:[%s221 + $0x78] sm:$0xff] %v272
        %s289 = sand.u32 %s98, 1
        %s290 = scalar_lea.sflag [#allocation4], %s289
        %s291 = sand.u32 %s98, 1
        %s292 = smul.addr %s291, 128
        %s293 = scalar_lea.vmem [#allocation7], %s292
        // Predicated region
        $region37: #{tpu_custom_call.1} parent=27 // pred_check
          %p294 = pneg %p108
        $region38: #{tpu_custom_call.1} parent=27 // pred_check_branch
          %296 = sbr.rel (%p294) target = $region40
        $region39: #{tpu_custom_call.1} parent=27 // pred_region
          %s297 = smul.u32 8, %s26
          %s299 = ssub.s32 2048, 2048
          %300 = vsyncadd %s290, %s299
          %s301 = smul.addr %s297, 2
          %s302 = smul.addr %s27, 64
          %s303 = sadd.s32 %s301, %s302
          %s304 = smul.addr %s303, 128
          %s305 = scalar_lea.hbm %s2, %s304
          %s306 = sshll.u32 %s293, 4
          %s307 = int_to_ptr.vmem [resolvable:$true] %s306
          %312 = dma.vmem_to_hbm [thread:$0]  %s307, 2048, %s305, %s290, 256, 256, 16
        $region40: #{tpu_custom_call.1} parent=27 // pred_fallthru
          _
      $region28: #{tpu_custom_call.1} parent=5 // pred_fallthru
        _
      %p313 = scmp.le.s32.totalorder 2, %s17
      // Predicated region
      $region41: #{tpu_custom_call.1} parent=5 // pred_check
        %p314 = pneg %p313
      $region42: #{tpu_custom_call.1} parent=5 // pred_check_branch
        %316 = sbr.rel (%p314) target = $region44
      $region43: #{tpu_custom_call.1} parent=5 // pred_region
        %s317 = ssub.s32 %s17, 2
        // Predicated region
        $region45: #{tpu_custom_call.1} parent=43 // pred_check
          %p318 = pneg %p114
        $region46: #{tpu_custom_call.1} parent=43 // pred_check_branch
          %320 = sbr.rel (%p318) target = $region48
        $region47: #{tpu_custom_call.1} parent=43 // pred_region
          %s321 = sand.u32 %s99, 1
          %s322 = scalar_lea.sflag [#allocation4], %s321
          %s323 = sand.u32 %s99, 1
          %s324 = smul.addr %s323, 128
          %s325 = scalar_lea.vmem [#allocation7], %s324
          %326 = dma.done %s322, 2048
        $region48: #{tpu_custom_call.1} parent=43 // pred_fallthru
          _
      $region44: #{tpu_custom_call.1} parent=5 // pred_fallthru
        _
    $region6: #{tpu_custom_call.1} parent=1 // loop_footer
      %s21 = sadd.s32 1, %s17
    $region7: #{tpu_custom_call.1} parent=1 // loop_footer_branch
      %16 = sbr.rel target = $region3
    $region8: #{tpu_custom_call.1} parent=1 // loop_exit
      _
    %327 = vsyncpa [#allocation3], 1
    %s328 = scalar_lea.sflag [#allocation3], 1
    %329 = vsyncpa %s328, 1
    %330 = vsyncpa [#allocation6], 1
    %s331 = scalar_lea.sflag [#allocation6], 1
    %332 = vsyncpa %s331, 1
    %333 = vsyncpa [#allocation4], 1
    %s334 = scalar_lea.sflag [#allocation4], 1
    %335 = vsyncpa %s334, 1

</llo_original>
